<compile_context>
chip_gen: v5e
topology: v5e:2x2
jax: 0.10.0
libtpu: 0.0.40
codegen_flags: <defaults>
</compile_context>

<pallas_src>
import jax
import jax.numpy as jnp
from jax.experimental import pallas as pl
from jax.experimental.pallas import tpu as pltpu

HIDDEN = 32
TB_MAX = 8192      # max lanes per grid step (common batches -> 1 grid step)
LANE_CHUNK = 1024  # in-kernel lane-slab size (keeps ~32 live vregs per slab)
MEGACORE_STEPS = 1  # set to 2 on v7x (2 TCs/chip) for large batches


def _round_up(n, m):
    return ((n + m - 1) // m) * m


def _pick_chunk(tb, max_chunk=LANE_CHUNK):
    """Largest multiple of 128 that divides tb and is <= max_chunk."""
    c = min(max_chunk, tb)
    while tb % c:
        c -= 128
    return c


def _make_kernel(chunk, n_chunks):
    """Kernel over one (1, tb) batch tile; features on sublanes, batch on lanes.

    x_ref     : (1, tb)   inputs, batch on the lane axis
    wpack_ref : (32, 4)   packed params: [:,0]=w12, [:,1]=b12, [:,2]=w3, [0,3]=b3
    o_ref     : (1, tb)   outputs, lane-dense unmasked stores
    """

    def kernel(x_ref, wpack_ref, o_ref):
        w12 = wpack_ref[:, 0:1]       # (32, 1)  fused layer-1/2 weight
        b12 = wpack_ref[:, 1:2]       # (32, 1)  fused layer-1/2 bias
        w3 = wpack_ref[:, 2:3]        # (32, 1)  last-layer weight
        b3 = wpack_ref[0:1, 3:4]      # (1, 1)   last-layer bias

        def process(j):
            x = x_ref[:, pl.ds(j, chunk)]                  # (1, chunk)
            # Fused Linear(1,32) -> Linear(32,32): VPU broadcast multiply/add.
            z = w12 * x + b12                              # (32, chunk)
            # ELU(alpha=1), forward-only (no clamp): overflowed exp lands in
            # the unselected branch of the select and is discarded.
            h = jnp.where(z > 0.0, z, jnp.exp(z) - 1.0)
            # Linear(32,1) as a 32-wide feature reduction; batch stays on
            # the lane axis -> (1, chunk) lane-dense output.
            o = jnp.sum(h * w3, axis=0, keepdims=True) + b3
            o_ref[:, pl.ds(j, chunk)] = o.astype(o_ref.dtype)

        if n_chunks == 1:
            process(0)
        else:
            def body(c, carry):
                process(pl.multiple_of(c * chunk, chunk))
                return carry
            jax.lax.fori_loop(0, n_chunks, body, 0, unroll=True)

    return kernel


def mlp_forward(x, w1, b1, w2, b2, w3, b3):
    """x: (B, 1) float32; weights stored as (in, out); biases as (1, out)."""
    if x.ndim == 0:
        x = x.reshape(1, 1)
    elif x.ndim == 1:
        x = x.reshape(-1, 1)
    B = x.shape[0]

    # --- algebraic fusion of layers 1+2 (valid since in_features == 1) and
    #     packing of all params into a single resident (32, 4) block ---------
    wpack = jnp.concatenate(
        [(w1 @ w2).T,                         # (32, 1) w12
         (b1 @ w2 + b2).T,                    # (32, 1) b12
         w3,                                  # (32, 1)
         jnp.broadcast_to(b3, (HIDDEN, 1))],  # (32, 1) b3 (row 0 used)
        axis=1,
    ).astype(jnp.float32)

    # --- lane-dense (1, B) layout: reshape is a layout no-op for (B, 1) -----
    xt = x.reshape(1, B)

    # --- tile selection: common batches -> exactly 1 grid step --------------
    bp = _round_up(B, 128)
    steps = max(1, -(-bp // TB_MAX))
    if MEGACORE_STEPS > 1 and bp >= MEGACORE_STEPS * 1024:
        steps = max(steps, MEGACORE_STEPS)
    tb = _round_up(-(-bp // steps), 128)
    bp = steps * tb
    if bp != B:
        xt = jnp.pad(xt, ((0, 0), (0, bp - B)))

    chunk = _pick_chunk(tb)
    n_chunks = tb // chunk

    out_t = pl.pallas_call(
        _make_kernel(chunk, n_chunks),
        out_shape=jax.ShapeDtypeStruct((1, bp), jnp.float32),
        grid_spec=pltpu.PrefetchScalarGridSpec(
            num_scalar_prefetch=0,
            grid=(steps,),
            in_specs=[
                pl.BlockSpec((1, tb), lambda i: (0, i)),        # x tile
                pl.BlockSpec((HIDDEN, 4), lambda i: (0, 0)),    # packed params
            ],
            out_specs=pl.BlockSpec((1, tb), lambda i: (0, i)),
        ),
        compiler_params=pltpu.CompilerParams(
            dimension_semantics=("parallel",),
        ),
    )(xt, wpack)

    if bp != B:
        out_t = out_t[:, :B]
    return out_t.reshape(B, 1)


def init_params(key):
    """Deterministic init mimicking nn.Linear's uniform(-1/sqrt(fan_in), ...)."""
    ks = jax.random.split(key, 6)

    def linear(kw, kb, fan_in, fan_out):
        bound = 1.0 / jnp.sqrt(jnp.float32(fan_in))
        # stored transposed: (in, out)
        w = jax.random.uniform(kw, (fan_in, fan_out), jnp.float32, -bound, bound)
        b = jax.random.uniform(kb, (1, fan_out), jnp.float32, -bound, bound)
        return w, b

    w1, b1 = linear(ks[0], ks[1], 1, HIDDEN)
    w2, b2 = linear(ks[2], ks[3], HIDDEN, HIDDEN)
    w3, b3 = linear(ks[4], ks[5], HIDDEN, 1)
    return w1, b1, w2, b2, w3, b3


def reference_forward(x, w1, b1, w2, b2, w3, b3):
    """Plain-XLA reference with the unfused weights (validates the fusion)."""
    h1 = x @ w1 + b1
    h2 = h1 @ w2 + b2
    h2 = jnp.where(h2 > 0, h2, jnp.expm1(jnp.minimum(h2, 0.0)))
    return h2 @ w3 + b3


if __name__ == "__main__":
    key = jax.random.PRNGKey(0)
    k_x, k_x2, k_p = jax.random.split(key, 3)

    params = init_params(k_p)

    # Small test matching the module (batch of scalar inputs, as the ODE
    # solver would evaluate the RHS at a handful of points). Single grid step,
    # single in-kernel chunk, no padding ops beyond one pad to 128 lanes.
    B = 8
    x = jax.random.normal(k_x, (B, 1), dtype=jnp.float32)
    out = jax.block_until_ready(mlp_forward(x, *params))
    ref = reference_forward(x, *params)
    assert out.shape == (B, 1)
    assert jnp.allclose(out, ref, atol=1e-5, rtol=1e-4), (out, ref)

    # Larger batch: exercises 128-padding + the single-step / multi-chunk path
    # (B=2500 -> one (1, 2560) tile processed in 640-lane slabs).
    B2 = 2500
    x2 = jax.random.normal(k_x2, (B2, 1), dtype=jnp.float32)
    out2 = jax.block_until_ready(mlp_forward(x2, *params))
    ref2 = reference_forward(x2, *params)
    assert out2.shape == (B2, 1)
    assert jnp.allclose(out2, ref2, atol=1e-5, rtol=1e-4), (out2, ref2)

    print("KERNEL_OK")
</pallas_src>

<mosaic_0001>
module attributes {stable_mosaic.version = 11 : i64} {
  func.func @kernel(%arg0: i32, %arg1: memref<1x128xf32, #tpu.memory_space<vmem>>, %arg2: memref<32x4xf32, #tpu.memory_space<vmem>>, %arg3: memref<1x128xf32, #tpu.memory_space<vmem>>) attributes {dimension_semantics = [#tpu.dimension_semantics<parallel>], iteration_bounds = array<i64: 1>, scalar_prefetch = 0 : i64, scratch_operands = 0 : i64, tpu.core_type = #tpu.core_type<tc>, window_params = [{transform_indices = @transform_0, window_bounds = array<i64: 1, 128>}, {pipeline_mode = #tpu.pipeline_mode<synchronous>, transform_indices = @transform_1, window_bounds = array<i64: 32, 4>}, {transform_indices = @transform_2, window_bounds = array<i64: 1, 128>}]} {
    %c0 = arith.constant 0 : index
    %c0_0 = arith.constant 0 : index
    %0 = vector.load %arg2[%c0, %c0_0] : memref<32x4xf32, #tpu.memory_space<vmem>>, vector<32x1xf32>
    %c0_1 = arith.constant 0 : index
    %c1 = arith.constant 1 : index
    %1 = vector.load %arg2[%c0_1, %c1] : memref<32x4xf32, #tpu.memory_space<vmem>>, vector<32x1xf32>
    %c0_2 = arith.constant 0 : index
    %c2 = arith.constant 2 : index
    %2 = vector.load %arg2[%c0_2, %c2] : memref<32x4xf32, #tpu.memory_space<vmem>>, vector<32x1xf32>
    %c0_3 = arith.constant 0 : index
    %c3 = arith.constant 3 : index
    %3 = vector.load %arg2[%c0_3, %c3] : memref<32x4xf32, #tpu.memory_space<vmem>>, vector<1x1xf32>
    %c0_4 = arith.constant 0 : index
    %c0_5 = arith.constant 0 : index
    %4 = vector.load %arg1[%c0_4, %c0_5] : memref<1x128xf32, #tpu.memory_space<vmem>>, vector<1x128xf32>
    %5 = vector.broadcast %0 : vector<32x1xf32> to vector<32x128xf32>
    %6 = vector.broadcast %4 : vector<1x128xf32> to vector<32x128xf32>
    %7 = arith.mulf %5, %6 : vector<32x128xf32>
    %8 = vector.broadcast %1 : vector<32x1xf32> to vector<32x128xf32>
    %9 = arith.addf %7, %8 : vector<32x128xf32>
    %cst = arith.constant 0.000000e+00 : f32
    %10 = vector.broadcast %cst : f32 to vector<32x128xf32>
    %11 = arith.cmpf ogt, %9, %10 : vector<32x128xf32>
    %12 = math.exp %9 : vector<32x128xf32>
    %cst_6 = arith.constant 1.000000e+00 : f32
    %13 = vector.broadcast %cst_6 : f32 to vector<32x128xf32>
    %14 = arith.subf %12, %13 : vector<32x128xf32>
    %15 = arith.select %11, %9, %14 : vector<32x128xi1>, vector<32x128xf32>
    %16 = vector.broadcast %2 : vector<32x1xf32> to vector<32x128xf32>
    %17 = arith.mulf %15, %16 : vector<32x128xf32>
    %cst_7 = arith.constant dense<0.000000e+00> : vector<128xf32>
    %18 = vector.multi_reduction <add>, %17, %cst_7 [0] : vector<32x128xf32> to vector<128xf32>
    %19 = vector.shape_cast %18 : vector<128xf32> to vector<1x128xf32>
    %20 = vector.broadcast %3 : vector<1x1xf32> to vector<1x128xf32>
    %21 = arith.addf %19, %20 : vector<1x128xf32>
    %c0_8 = arith.constant 0 : index
    %c0_9 = arith.constant 0 : index
    %22 = vector.load %arg3[%c0_8, %c0_9] : memref<1x128xf32, #tpu.memory_space<vmem>>, vector<1x128xf32>
    tpu.vector_store %arg3[%c0_8, %c0_9], %21 {strides = array<i32>} : memref<1x128xf32, #tpu.memory_space<vmem>>, vector<1x128xf32>,
    return
  }
  func.func @transform_0(%arg0: i32) -> (i32, i32) {
    %c0_i32 = arith.constant 0 : i32
    %c0_i32_0 = arith.constant 0 : i32
    return %c0_i32, %arg0 : i32, i32
  }
  func.func @transform_1(%arg0: i32) -> (i32, i32) {
    %c0_i32 = arith.constant 0 : i32
    %c0_i32_0 = arith.constant 0 : i32
    %c0_i32_1 = arith.constant 0 : i32
    return %c0_i32, %c0_i32_0 : i32, i32
  }
  func.func @transform_2(%arg0: i32) -> (i32, i32) {
    %c0_i32 = arith.constant 0 : i32
    %c0_i32_0 = arith.constant 0 : i32
    return %c0_i32, %arg0 : i32, i32
  }
}

</mosaic_0001>

<llo_original>
// kernel: tpu_custom_call.1
$region0: #{tpu_custom_call.1}
  #allocation0 [shape = 'u32[]', space=smem, size = 0x4, offset = 0x4, fixed_abs, tag = 'smem constant byte address 0x4 - core index']
  #allocation1 [shape = 'u32[72,128]{1,0:T(1,128)}', space=vmem, size = 0x9000, scoped, tag = 'internal scratch']
  %s0 = inlined_call_operand.vmem [shape: f32[1,128], index: 0, kind: input, shape index: {}]
  %s1 = inlined_call_operand.vmem [shape: f32[32,4], index: 1, kind: input, shape index: {}]
  %s2 = inlined_call_operand.hbm [shape: f32[1,128], index: 2, kind: output, shape index: {}]
  %s3 = sld [smem:[#allocation0]]
  $region18: #{tpu_custom_call.1} parent=0
    _
  %s5 = ssub.s32 1, %s3
  %s6 = scalar_select 0, %s5, %s3
  $region1: #{tpu_custom_call.1} parent=0
    #allocation2 [shape = 'u8[512]{0}', space=vmem, size = 0x400, scoped, tag = 'output window, operand 0, single buffered']
    #allocation3 [shape = 's32[1]{0}', space=sflag, size = 0x4, scoped, tag = 'scoped memory for tpu_custom_call.1']
    %7 = vsyncpa [#allocation3], 0
    // Predicated region
    $region2: #{tpu_custom_call.1} parent=1 // pred_check
      _
    $region3: #{tpu_custom_call.1} parent=1 // pred_check_branch
      %9 = sbr.rel (0) target = $region5
    $region4: #{tpu_custom_call.1} parent=1 // pred_region
      _
    $region5: #{tpu_custom_call.1} parent=1 // pred_fallthru
      _
    // Predicated region
    $region6: #{tpu_custom_call.1} parent=1 // pred_check
      _
    $region7: #{tpu_custom_call.1} parent=1 // pred_check_branch
      %11 = sbr.rel (0) target = $region9
    $region8: #{tpu_custom_call.1} parent=1 // pred_region
      _
    $region9: #{tpu_custom_call.1} parent=1 // pred_fallthru
      _
    %v12 = vld [vmem:[%s1] sm:$0xff]
    %v13 = vld [vmem:[%s1 + $0x8] sm:$0xff]
    %v14 = vld [vmem:[%s1 + $0x10] sm:$0xff]
    %v15 = vld [vmem:[%s1 + $0x18] sm:$0xff]
    %v16 = vld [vmem:[%s1] sm:$0x1]
    %v17 = vld [vmem:[%s0] sm:$0x1]
    %19 = vset.pattern.permute.xlu0 0
    %20 = vperm.xlu0 %19, %v12
    %v21 = vpop.permute.xlu0 %20
    %24 = vset.pattern.permute.xlu0 0
    %25 = vperm.xlu0 %24, %v13
    %v26 = vpop.permute.xlu0 %25
    %29 = vset.pattern.permute.xlu0 0
    %30 = vperm.xlu0 %29, %v14
    %v31 = vpop.permute.xlu0 %30
    %34 = vset.pattern.permute.xlu0 0
    %35 = vperm.xlu0 %34, %v15
    %v36 = vpop.permute.xlu0 %35
    %v39 = vperm.slane %v17, 0
    %v41 = vmul.f32 %v21, %v39
    %v42 = vmul.f32 %v26, %v39
    %v43 = vmul.f32 %v31, %v39
    %v44 = vmul.f32 %v36, %v39
    %45 = vset.pattern.permute.xlu0 1
    %46 = vperm.xlu0 %45, %v12
    %v47 = vpop.permute.xlu0 %46
    %49 = vset.pattern.permute.xlu0 1
    %50 = vperm.xlu0 %49, %v13
    %v51 = vpop.permute.xlu0 %50
    %53 = vset.pattern.permute.xlu0 1
    %54 = vperm.xlu0 %53, %v14
    %v55 = vpop.permute.xlu0 %54
    %57 = vset.pattern.permute.xlu0 1
    %58 = vperm.xlu0 %57, %v15
    %v59 = vpop.permute.xlu0 %58
    %v61 = vadd.f32 %v41, %v47
    %v62 = vadd.f32 %v42, %v51
    %v63 = vadd.f32 %v43, %v55
    %v64 = vadd.f32 %v44, %v59
    %vm65 = vcmp.gt.f32.partialorder %v61, 0.0
    %vm66 = vcmp.gt.f32.partialorder %v62, 0.0
    %vm67 = vcmp.gt.f32.partialorder %v63, 0.0
    %vm68 = vcmp.gt.f32.partialorder %v64, 0.0
    %v69 = vmul.f32 %v61, 1.442695
    %v70 = vpow.pop %v69
    %v71 = vmul.f32 %v62, 1.442695
    %v72 = vpow.pop %v71
    %v73 = vmul.f32 %v63, 1.442695
    %v74 = vpow.pop %v73
    %v75 = vmul.f32 %v64, 1.442695
    %v76 = vpow.pop %v75
    %v77 = vsub.f32 %v70, 1.0
    %v78 = vsub.f32 %v72, 1.0
    %v79 = vsub.f32 %v74, 1.0
    %v80 = vsub.f32 %v76, 1.0
    %v81 = vsel %vm65, %v61, %v77
    %v82 = vsel %vm66, %v62, %v78
    %v83 = vsel %vm67, %v63, %v79
    %v84 = vsel %vm68, %v64, %v80
    %85 = vset.pattern.permute.xlu0 2
    %86 = vperm.xlu0 %85, %v12
    %v87 = vpop.permute.xlu0 %86
    %89 = vset.pattern.permute.xlu0 2
    %90 = vperm.xlu0 %89, %v13
    %v91 = vpop.permute.xlu0 %90
    %93 = vset.pattern.permute.xlu0 2
    %94 = vperm.xlu0 %93, %v14
    %v95 = vpop.permute.xlu0 %94
    %97 = vset.pattern.permute.xlu0 2
    %98 = vperm.xlu0 %97, %v15
    %v99 = vpop.permute.xlu0 %98
    %v101 = vmul.f32 %v81, %v87
    %v102 = vmul.f32 %v82, %v91
    %v103 = vmul.f32 %v83, %v95
    %v104 = vmul.f32 %v84, %v99
    %v105 = vadd.f32 %v101, %v102
    %v106 = vadd.f32 %v105, %v103
    %v107 = vadd.f32 %v106, %v104
    %v108 = vrot.slane %v107, 4
    %v109 = vadd.f32 %v107, %v108
    %v110 = vrot.slane %v109, 2
    %v111 = vadd.f32 %v109, %v110
    %v112 = vrot.slane %v111, 1
    %v113 = vadd.f32 %v111, %v112
    %115 = vset.pattern.permute.xlu0 3
    %116 = vperm.xlu0 %115, %v16
    %v117 = vpop.permute.xlu0 %116
    %v119 = vadd.f32 %v113, %v117
    %120 = vst [vmem:[#allocation2] sm:$0x1] %v119
    // Predicated region
    $region10: #{tpu_custom_call.1} parent=1 // pred_check
      _
    $region11: #{tpu_custom_call.1} parent=1 // pred_check_branch
      %122 = sbr.rel (0) target = $region13
    $region12: #{tpu_custom_call.1} parent=1 // pred_region
      %124 = vsyncadd [#allocation3], 0
      %s126 = sshll.u32 [#allocation2], 4
      %s127 = int_to_ptr.vmem [resolvable:$true] %s126
      %s128 = sshll.u32 %s2, 4
      %s129 = int_to_ptr.hbm [resolvable:$true] %s128
      %131 = dma.vmem_to_hbm [thread:$0]  %s127, 16, %s129, [#allocation3]
    $region13: #{tpu_custom_call.1} parent=1 // pred_fallthru
      _
    // Predicated region
    $region14: #{tpu_custom_call.1} parent=1 // pred_check
      _
    $region15: #{tpu_custom_call.1} parent=1 // pred_check_branch
      %133 = sbr.rel (0) target = $region17
    $region16: #{tpu_custom_call.1} parent=1 // pred_region
      %135 = dma.done [#allocation3], 16
    $region17: #{tpu_custom_call.1} parent=1 // pred_fallthru
      _
    %136 = vsyncpa [#allocation3], 1

</llo_original>
